<compile_context>
chip_gen: v7x
topology: tpu7x:2x2x1
jax: 0.10.0
libtpu: 0.0.40
codegen_flags: <defaults>
</compile_context>

<pallas_src>
import functools
import math

import jax
import jax.numpy as jnp
from jax import lax
from jax.experimental import pallas as pl
from jax.experimental.pallas import tpu as pltpu

BN_EPS = 1e-5
BN_SCALE = 1.0 / math.sqrt(1.0 + BN_EPS)      # eval BN: mean=0, var=1, gamma=1, beta=0
VMEM_LIMIT = 48 * 1024 * 1024


def _round_up(x, m):
    return (x + m - 1) // m * m


# ---------------------------------------------------------------------------
# Pallas kernel 1: direct 3x3 stride-1 conv (NHWC, bf16 in/out, f32 acc)
# with in-kernel zero padding, dx-fused K=3*Cin matmuls and fused residual.
# ---------------------------------------------------------------------------

def _conv3x3_kernel(xm_ref, xt_ref, xb_ref, *rest, d, relu, has_res):
    if has_res:
        res_ref, w_ref, o_ref, acc_ref = rest
    else:
        res_ref = None
        w_ref, o_ref, acc_ref = rest
    i = pl.program_id(1)
    nrow = pl.num_programs(1)
    rh, W, cin = xm_ref.shape[1], xm_ref.shape[2], xm_ref.shape[3]
    cout = o_ref.shape[3]

    def shift_cat(x):
        # (rows, W, cin) -> (rows, W, 3*cin) holding [x[w-d], x[w], x[w+d]]
        # with zero fill at the W edges; dx block order matches
        # w.reshape(3, 3*cin, cout).
        rows = x.shape[0]
        z = jnp.zeros((rows, d, cin), x.dtype)
        x0 = jnp.concatenate([z, x[:, :W - d, :]], axis=1)     # dx = 0
        x2 = jnp.concatenate([x[:, d:, :], z], axis=1)         # dx = 2
        return jnp.concatenate([x0, x, x2], axis=-1)

    xm = shift_cat(xm_ref[0])                                   # (rh, W, 3*cin)

    # dy = 1 (centre tap row): all rh output rows.
    acc_ref[...] = jnp.dot(xm.reshape(rh * W, 3 * cin), w_ref[1],
                           preferred_element_type=jnp.float32)
    # dy = 0: main input rows [0, rh-d) -> output rows [d, rh).
    acc_ref[pl.ds(d * W, (rh - d) * W), :] += jnp.dot(
        xm[:rh - d].reshape((rh - d) * W, 3 * cin), w_ref[0],
        preferred_element_type=jnp.float32)
    # dy = 2: main input rows [d, rh) -> output rows [0, rh-d).
    acc_ref[pl.ds(0, (rh - d) * W), :] += jnp.dot(
        xm[d:].reshape((rh - d) * W, 3 * cin), w_ref[2],
        preferred_element_type=jnp.float32)

    @pl.when(i > 0)                       # top halo (implicit zeros at i == 0)
    def _():
        xt = shift_cat(xt_ref[0])
        acc_ref[pl.ds(0, d * W), :] += jnp.dot(
            xt.reshape(d * W, 3 * cin), w_ref[0],
            preferred_element_type=jnp.float32)

    @pl.when(i < nrow - 1)                # bottom halo (implicit zeros at last)
    def _():
        xb = shift_cat(xb_ref[0])
        acc_ref[pl.ds((rh - d) * W, d * W), :] += jnp.dot(
            xb.reshape(d * W, 3 * cin), w_ref[2],
            preferred_element_type=jnp.float32)

    y = acc_ref[...]
    if has_res:
        y = y + res_ref[0].reshape(rh * W, cout).astype(jnp.float32)
    if relu:
        y = jnp.maximum(y, 0.0)
    o_ref[...] = y.reshape(1, rh, W, cout).astype(o_ref.dtype)


def _pick_rh(H, W, cin, cout, d):
    """Row-block height: divisor of H, multiple of d, VMEM-bounded, and with
    >= 4 row blocks when possible (keeps both v7x TensorCores pipelined)."""
    def vmem_est(rh):   # main(x2) + 3x shifted window + out/res(x2) + f32 acc
        return rh * W * (16 * cin + 16 * cout + 4 * cout)

    fits = [rh for rh in range(2 * d, H + 1)
            if H % rh == 0 and rh % d == 0 and vmem_est(rh) <= 8 * 1024 * 1024]
    if not fits:
        cands = [rh for rh in range(2 * d, H + 1) if H % rh == 0 and rh % d == 0]
        return min(cands) if cands else H
    big = [rh for rh in fits if H // rh >= 4]
    return max(big) if big else max(fits)


def conv3x3_s1(x, w, dilation, relu, residual=None):
    """3x3 / stride-1 / padding=dilation conv (NHWC, bf16), optional fused
    residual add.  w: (3,3,Cin,Cout) bf16."""
    B, H, W, cin = x.shape
    cout = w.shape[3]
    d = dilation
    assert H % d == 0
    x = x.astype(jnp.bfloat16)
    rh = _pick_rh(H, W, cin, cout, d)
    hb = rh // d                 # number of d-sized halo blocks per main block
    nhd = H // d                 # number of d-sized blocks along H
    has_res = residual is not None

    in_specs = [
        pl.BlockSpec((1, rh, W, cin), lambda b, i: (b, i, 0, 0)),
        pl.BlockSpec((1, d, W, cin),
                     lambda b, i: (b, jnp.maximum(i * hb - 1, 0), 0, 0)),
        pl.BlockSpec((1, d, W, cin),
                     lambda b, i: (b, jnp.minimum((i + 1) * hb, nhd - 1), 0, 0)),
    ]
    args = [x, x, x]
    if has_res:
        in_specs.append(pl.BlockSpec((1, rh, W, cout), lambda b, i: (b, i, 0, 0)))
        args.append(residual.astype(jnp.bfloat16))
    in_specs.append(pl.BlockSpec((3, 3 * cin, cout), lambda b, i: (0, 0, 0)))
    args.append(w.reshape(3, 3 * cin, cout))

    return pl.pallas_call(
        functools.partial(_conv3x3_kernel, d=d, relu=relu, has_res=has_res),
        out_shape=jax.ShapeDtypeStruct((B, H, W, cout), jnp.bfloat16),
        grid_spec=pltpu.PrefetchScalarGridSpec(
            num_scalar_prefetch=0,
            grid=(B, H // rh),
            in_specs=in_specs,
            out_specs=pl.BlockSpec((1, rh, W, cout), lambda b, i: (b, i, 0, 0)),
            scratch_shapes=[pltpu.VMEM((rh * W, cout), jnp.float32)],
        ),
        compiler_params=pltpu.CompilerParams(
            dimension_semantics=("parallel", "parallel"),
            vmem_limit_bytes=VMEM_LIMIT),
    )(*args)


# ---------------------------------------------------------------------------
# Pallas kernel 2: single-shot GEMM with fused optional ReLU (1x1 convs and
# the two stride-2 3x3 convs via a tiny im2col).  No bias (always zero here).
# ---------------------------------------------------------------------------

def _gemm_act_kernel(a_ref, b_ref, o_ref, *, relu):
    y = jnp.dot(a_ref[...], b_ref[...], preferred_element_type=jnp.float32)
    if relu:
        y = jnp.maximum(y, 0.0)
    o_ref[...] = y.astype(o_ref.dtype)


def pallas_gemm_act(A, Bm, relu, out_dtype=jnp.bfloat16):
    """out = act(A @ Bm).  A:(M,K), Bm:(K,N) bf16."""
    M, K = A.shape
    N = Bm.shape[1]
    A = A.astype(jnp.bfloat16)
    tm = min(1024, _round_up(M, 8))
    Mp = _round_up(M, tm)
    tn = 128
    Np = _round_up(N, tn)
    if Mp != M:
        A = jnp.pad(A, ((0, Mp - M), (0, 0)))
    Bp = Bm if Np == N else jnp.pad(Bm, ((0, 0), (0, Np - N)))
    out = pl.pallas_call(
        functools.partial(_gemm_act_kernel, relu=relu),
        out_shape=jax.ShapeDtypeStruct((Mp, Np), out_dtype),
        grid_spec=pltpu.PrefetchScalarGridSpec(
            num_scalar_prefetch=0,
            grid=(Mp // tm, Np // tn),
            in_specs=[
                pl.BlockSpec((tm, K), lambda i, j: (i, 0)),
                pl.BlockSpec((K, tn), lambda i, j: (0, j)),
            ],
            out_specs=pl.BlockSpec((tm, tn), lambda i, j: (i, j)),
        ),
        compiler_params=pltpu.CompilerParams(
            dimension_semantics=("parallel", "parallel"),
            vmem_limit_bytes=VMEM_LIMIT),
    )(A, Bp)
    if Mp != M or Np != N:
        out = out[:M, :N]
    return out


# ---------------------------------------------------------------------------
# Conv dispatcher (NHWC): Conv2d(bias=False) + eval-BN (folded) + optional
# ReLU + optional fused residual.
# ---------------------------------------------------------------------------

def conv2d(x, p, stride, dilation, relu, residual=None, out_dtype=jnp.bfloat16):
    w = p["w"]
    if w.ndim == 2:                                   # 1x1 conv
        assert residual is None
        if stride > 1:
            x = x[:, ::stride, ::stride, :]
        B, H, W, cin = x.shape
        out = pallas_gemm_act(x.reshape(B * H * W, cin), w, relu, out_dtype)
        return out.reshape(B, H, W, w.shape[1])
    if stride == 1:                                   # 3x3 stride-1 (hot path)
        return conv3x3_s1(x, w, dilation, relu, residual)
    # 3x3 stride-2 (only 2 occurrences, shallow K): tiny im2col + GEMM
    assert residual is None
    B, H, W, cin = x.shape
    cout = w.shape[3]
    d = dilation
    xp = jnp.pad(x.astype(jnp.bfloat16), ((0, 0), (d, d), (d, d), (0, 0)))
    Ho = (H + 2 * d - d * 2 - 1) // stride + 1
    Wo = (W + 2 * d - d * 2 - 1) // stride + 1
    cols = [xp[:, dy * d:dy * d + stride * (Ho - 1) + 1:stride,
               dx * d:dx * d + stride * (Wo - 1) + 1:stride, :]
            for dy in range(3) for dx in range(3)]
    A = jnp.concatenate(cols, axis=-1).reshape(B * Ho * Wo, 9 * cin)
    out = pallas_gemm_act(A, w.reshape(9 * cin, cout), relu, out_dtype)
    return out.reshape(B, Ho, Wo, cout)


def avgpool_nhwc(x, k):
    B, H, W, C = x.shape
    y = x.astype(jnp.float32).reshape(B, H // k, k, W // k, k, C).mean(axis=(2, 4))
    return y.astype(jnp.bfloat16)


# ---------------------------------------------------------------------------
# Parameters (deterministic init matching the PyTorch module's shapes)
# ---------------------------------------------------------------------------

class ParamGen:
    def __init__(self, seed=0):
        self.key = jax.random.PRNGKey(seed)

    def normal(self, shape, std):
        self.key, k = jax.random.split(self.key)
        return std * jax.random.normal(k, shape, jnp.float32)


def _conv3x3_p(pg, cin, cout, bn=True):
    w = pg.normal((3, 3, cin, cout), math.sqrt(2.0 / (9 * cout)))
    if bn:
        w = w * BN_SCALE          # fold eval-mode BN scale into the weights
    return {"w": w.astype(jnp.bfloat16)}


def _conv1x1_p(pg, cin, cout, bn=True):
    w = pg.normal((cin, cout), math.sqrt(2.0 / cout))
    if bn:
        w = w * BN_SCALE
    return {"w": w.astype(jnp.bfloat16)}


def make_feature_extraction_params(seed=0):
    pg = ParamGen(seed)
    P = {"firstconv": [_conv3x3_p(pg, 3, 32),
                       _conv3x3_p(pg, 32, 32),
                       _conv3x3_p(pg, 32, 32)]}
    inplanes = [32]

    def make_layer(planes, blocks, stride):
        layer = []
        for bi in range(blocks):
            ds = None
            if bi == 0 and (stride != 1 or inplanes[0] != planes):
                ds = _conv1x1_p(pg, inplanes[0], planes)
            layer.append({"conv1": _conv3x3_p(pg, inplanes[0], planes),
                          "conv2": _conv3x3_p(pg, planes, planes),
                          "downsample": ds})
            inplanes[0] = planes
        rest = jax.tree_util.tree_map(lambda *xs: jnp.stack(xs), *layer[1:])
        return {"first": layer[0], "rest": rest}

    P["layer1"] = make_layer(32, 3, 1)
    P["layer2"] = make_layer(64, 16, 2)
    P["layer3"] = make_layer(128, 3, 1)
    P["layer4"] = make_layer(128, 3, 1)
    P["branches"] = [_conv1x1_p(pg, 128, 32) for _ in range(4)]
    P["lastconv1"] = _conv3x3_p(pg, 320, 128)
    P["lastconv2"] = _conv1x1_p(pg, 128, 32, bn=False)   # plain Conv2d, no BN
    return P


# ---------------------------------------------------------------------------
# Forward pass (matches feature_extraction.forward, eval-mode BN)
# ---------------------------------------------------------------------------

def basic_block(x, bp, stride, dilation):
    out = conv2d(x, bp["conv1"], stride, dilation, relu=True)
    if bp["downsample"] is not None:
        res = conv2d(x, bp["downsample"], stride, 1, relu=False)
    else:
        res = x
    # residual add fused into conv2's epilogue (no final ReLU in BasicBlock)
    return conv2d(out, bp["conv2"], 1, dilation, relu=False, residual=res)


def run_layer(x, layer_p, stride, dilation):
    x = basic_block(x, layer_p["first"], stride, dilation)

    def body(h, bp):
        return basic_block(h, bp, 1, dilation), None

    x, _ = lax.scan(body, x, layer_p["rest"])
    return x


def feature_extraction_fwd(x_nchw, P):
    x = jnp.transpose(x_nchw, (0, 2, 3, 1)).astype(jnp.bfloat16)   # NCHW -> NHWC
    out = conv2d(x, P["firstconv"][0], 2, 1, relu=True)
    out = conv2d(out, P["firstconv"][1], 1, 1, relu=True)
    out = conv2d(out, P["firstconv"][2], 1, 1, relu=True)
    out = run_layer(out, P["layer1"], 1, 1)
    output_raw = run_layer(out, P["layer2"], 2, 1)
    out = run_layer(output_raw, P["layer3"], 1, 1)
    output_skip = run_layer(out, P["layer4"], 1, 2)

    B, H4, W4, _ = output_skip.shape
    branches = []
    for p, pool in zip(P["branches"], (64, 32, 16, 8)):
        y = avgpool_nhwc(output_skip, pool)
        y = conv2d(y, p, 1, 1, relu=True)
        # TODO(synk): F.upsample bilinear align_corners default differs across
        # old PyTorch versions; half-pixel (align_corners=False) is used here.
        y = jax.image.resize(y.astype(jnp.float32), (B, H4, W4, 32),
                             method="bilinear").astype(jnp.bfloat16)
        branches.append(y)
    b1, b2, b3, b4 = branches
    feat = jnp.concatenate([output_raw, output_skip, b4, b3, b2, b1], axis=-1)
    feat = conv2d(feat, P["lastconv1"], 1, 1, relu=True)
    feat = conv2d(feat, P["lastconv2"], 1, 1, relu=False, out_dtype=jnp.float32)
    return jnp.transpose(feat, (0, 3, 1, 2))                  # NHWC -> NCHW, f32


# ---------------------------------------------------------------------------
# Correctness self-checks of the Pallas kernels vs XLA convolution
# (same bf16-rounded inputs, f32 reference -> tight tolerance)
# ---------------------------------------------------------------------------

def _ref_conv(x, w, stride, d, relu, res=None):
    y = lax.conv_general_dilated(
        x.astype(jnp.float32), w.astype(jnp.float32),
        window_strides=(stride, stride), padding=((d, d), (d, d)),
        rhs_dilation=(d, d), dimension_numbers=("NHWC", "HWIO", "NHWC"))
    if res is not None:
        y = y + res.astype(jnp.float32)
    return jnp.maximum(y, 0.0) if relu else y


def _rel_err(got, ref):
    return float(jnp.max(jnp.abs(got.astype(jnp.float32) - ref)) /
                 (jnp.max(jnp.abs(ref)) + 1e-6))


def _self_check():
    key = jax.random.PRNGKey(1)
    kx, kw, kr = jax.random.split(key, 3)
    for d in (1, 2):
        x = jax.random.normal(kx, (2, 16, 16, 16), jnp.float32).astype(jnp.bfloat16)
        w = jax.random.normal(kw, (3, 3, 16, 32), jnp.float32).astype(jnp.bfloat16)
        r = jax.random.normal(kr, (2, 16, 16, 32), jnp.float32).astype(jnp.bfloat16)
        for res in (None, r):
            relu = res is None
            got = conv3x3_s1(x, w, d, relu=relu, residual=res)
            ref = _ref_conv(x, w, 1, d, relu=relu, res=res)
            err = _rel_err(got, ref)
            assert err < 1e-2, ("conv3x3_s1", d, res is not None, err)
    # stride-2 im2col + GEMM path
    x = jax.random.normal(kx, (1, 16, 16, 4), jnp.float32).astype(jnp.bfloat16)
    w = jax.random.normal(kw, (3, 3, 4, 8), jnp.float32).astype(jnp.bfloat16)
    got = conv2d(x, {"w": w}, 2, 1, relu=True)
    ref = _ref_conv(x, w, 2, 1, relu=True)
    err = _rel_err(got, ref)
    assert err < 1e-2, ("conv3x3_s2", err)


if __name__ == "__main__":
    _self_check()

    # H=W=256 is the smallest input consistent with the module: the pyramid
    # branch AvgPool2d((64,64)) requires the 1/4-resolution feature map to be
    # at least 64x64.
    B, H, W = 1, 256, 256
    x = jax.random.normal(jax.random.PRNGKey(0), (B, 3, H, W), jnp.float32)
    params = make_feature_extraction_params(seed=0)

    fwd = jax.jit(feature_extraction_fwd)
    out = jax.block_until_ready(fwd(x, params))
    assert out.shape == (B, 32, H // 4, W // 4), out.shape
    assert bool(jnp.all(jnp.isfinite(out)))
    print("KERNEL_OK")
</pallas_src>

<mosaic_0001>
module attributes {stable_mosaic.version = 11 : i64} {
  func.func @_conv3x3_kernel(%arg0: i32, %arg1: i32, %arg2: memref<1x4x16x16xbf16, #tpu.memory_space<vmem>>, %arg3: memref<1x1x16x16xbf16, #tpu.memory_space<vmem>>, %arg4: memref<1x1x16x16xbf16, #tpu.memory_space<vmem>>, %arg5: memref<3x48x32xbf16, #tpu.memory_space<vmem>>, %arg6: memref<1x4x16x32xbf16, #tpu.memory_space<vmem>>, %arg7: memref<64x32xf32, #tpu.memory_space<vmem>>) attributes {dimension_semantics = [#tpu.dimension_semantics<parallel>, #tpu.dimension_semantics<parallel>], iteration_bounds = array<i64: 2, 4>, scalar_prefetch = 0 : i64, scratch_operands = 1 : i64, tpu.core_type = #tpu.core_type<tc>, window_params = [{transform_indices = @transform_0, window_bounds = array<i64: 1, 4, 16, 16>}, {transform_indices = @transform_1, window_bounds = array<i64: 1, 1, 16, 16>}, {transform_indices = @transform_2, window_bounds = array<i64: 1, 1, 16, 16>}, {pipeline_mode = #tpu.pipeline_mode<synchronous>, transform_indices = @transform_3, window_bounds = array<i64: 3, 48, 32>}, {transform_indices = @transform_4, window_bounds = array<i64: 1, 4, 16, 32>}]} {
    %c0 = arith.constant 0 : index
    %c0_0 = arith.constant 0 : index
    %c0_1 = arith.constant 0 : index
    %c0_2 = arith.constant 0 : index
    %0 = vector.load %arg2[%c0, %c0_0, %c0_1, %c0_2] : memref<1x4x16x16xbf16, #tpu.memory_space<vmem>>, vector<1x4x16x16xbf16>
    %1 = vector.shape_cast %0 : vector<1x4x16x16xbf16> to vector<4x16x16xbf16>
    %cst = arith.constant 0.000000e+00 : bf16
    %2 = vector.broadcast %cst : bf16 to vector<4x1x16xbf16>
    %3 = vector.extract_strided_slice %1 {offsets = [0, 0, 0], sizes = [4, 15, 16], strides = [1, 1, 1]} : vector<4x16x16xbf16> to vector<4x15x16xbf16>
    %4 = tpu.concatenate %2, %3 in 1 : vector<4x1x16xbf16>, vector<4x15x16xbf16> -> vector<4x16x16xbf16>
    %5 = vector.extract_strided_slice %1 {offsets = [0, 1, 0], sizes = [4, 15, 16], strides = [1, 1, 1]} : vector<4x16x16xbf16> to vector<4x15x16xbf16>
    %6 = tpu.concatenate %5, %2 in 1 : vector<4x15x16xbf16>, vector<4x1x16xbf16> -> vector<4x16x16xbf16>
    %7 = tpu.concatenate %4, %1, %6 in 2 : vector<4x16x16xbf16>, vector<4x16x16xbf16>, vector<4x16x16xbf16> -> vector<4x16x48xbf16>
    %8 = vector.shape_cast %7 : vector<4x16x48xbf16> to vector<64x48xbf16>
    %c1 = arith.constant 1 : index
    %c0_3 = arith.constant 0 : index
    %c0_4 = arith.constant 0 : index
    %9 = vector.load %arg5[%c1, %c0_3, %c0_4] : memref<3x48x32xbf16, #tpu.memory_space<vmem>>, vector<1x48x32xbf16>
    %10 = vector.shape_cast %9 : vector<1x48x32xbf16> to vector<48x32xbf16>
    %cst_5 = arith.constant dense<0.000000e+00> : vector<64x32xf32>
    %11 = tpu.matmul %8, %10, %cst_5 {dimension_numbers = #tpu.dot_dimension_numbers<[1], [0], [0], [1], [0, 0, 1, 1], [], []>} : vector<64x48xbf16>, vector<48x32xbf16>, vector<64x32xf32> -> vector<64x32xf32>
    %c0_6 = arith.constant 0 : index
    %c0_7 = arith.constant 0 : index
    %12 = vector.load %arg7[%c0_6, %c0_7] : memref<64x32xf32, #tpu.memory_space<vmem>>, vector<64x32xf32>
    tpu.vector_store %arg7[%c0_6, %c0_7], %11 {strides = array<i32>} : memref<64x32xf32, #tpu.memory_space<vmem>>, vector<64x32xf32>,
    %c16 = arith.constant 16 : index
    %c0_8 = arith.constant 0 : index
    %13 = vector.load %arg7[%c16, %c0_8] : memref<64x32xf32, #tpu.memory_space<vmem>>, vector<48x32xf32>
    %14 = vector.extract_strided_slice %7 {offsets = [0, 0, 0], sizes = [3, 16, 48], strides = [1, 1, 1]} : vector<4x16x48xbf16> to vector<3x16x48xbf16>
    %15 = vector.shape_cast %14 : vector<3x16x48xbf16> to vector<48x48xbf16>
    %c0_9 = arith.constant 0 : index
    %c0_10 = arith.constant 0 : index
    %c0_11 = arith.constant 0 : index
    %16 = vector.load %arg5[%c0_9, %c0_10, %c0_11] : memref<3x48x32xbf16, #tpu.memory_space<vmem>>, vector<1x48x32xbf16>
    %17 = vector.shape_cast %16 : vector<1x48x32xbf16> to vector<48x32xbf16>
    %cst_12 = arith.constant dense<0.000000e+00> : vector<48x32xf32>
    %18 = tpu.matmul %15, %17, %cst_12 {dimension_numbers = #tpu.dot_dimension_numbers<[1], [0], [0], [1], [0, 0, 1, 1], [], []>} : vector<48x48xbf16>, vector<48x32xbf16>, vector<48x32xf32> -> vector<48x32xf32>
    %19 = arith.addf %13, %18 : vector<48x32xf32>
    %c16_13 = arith.constant 16 : index
    %c0_14 = arith.constant 0 : index
    %20 = vector.load %arg7[%c16_13, %c0_14] : memref<64x32xf32, #tpu.memory_space<vmem>>, vector<48x32xf32>
    tpu.vector_store %arg7[%c16_13, %c0_14], %19 {strides = array<i32>} : memref<64x32xf32, #tpu.memory_space<vmem>>, vector<48x32xf32>,
    %c0_15 = arith.constant 0 : index
    %c0_16 = arith.constant 0 : index
    %21 = vector.load %arg7[%c0_15, %c0_16] : memref<64x32xf32, #tpu.memory_space<vmem>>, vector<48x32xf32>
    %22 = vector.extract_strided_slice %7 {offsets = [1, 0, 0], sizes = [3, 16, 48], strides = [1, 1, 1]} : vector<4x16x48xbf16> to vector<3x16x48xbf16>
    %23 = vector.shape_cast %22 : vector<3x16x48xbf16> to vector<48x48xbf16>
    %c2 = arith.constant 2 : index
    %c0_17 = arith.constant 0 : index
    %c0_18 = arith.constant 0 : index
    %24 = vector.load %arg5[%c2, %c0_17, %c0_18] : memref<3x48x32xbf16, #tpu.memory_space<vmem>>, vector<1x48x32xbf16>
    %25 = vector.shape_cast %24 : vector<1x48x32xbf16> to vector<48x32xbf16>
    %cst_19 = arith.constant dense<0.000000e+00> : vector<48x32xf32>
    %26 = tpu.matmul %23, %25, %cst_19 {dimension_numbers = #tpu.dot_dimension_numbers<[1], [0], [0], [1], [0, 0, 1, 1], [], []>} : vector<48x48xbf16>, vector<48x32xbf16>, vector<48x32xf32> -> vector<48x32xf32>
    %27 = arith.addf %21, %26 : vector<48x32xf32>
    %c0_20 = arith.constant 0 : index
    %c0_21 = arith.constant 0 : index
    %28 = vector.load %arg7[%c0_20, %c0_21] : memref<64x32xf32, #tpu.memory_space<vmem>>, vector<48x32xf32>
    tpu.vector_store %arg7[%c0_20, %c0_21], %27 {strides = array<i32>} : memref<64x32xf32, #tpu.memory_space<vmem>>, vector<48x32xf32>,
    %c0_i32 = arith.constant 0 : i32
    %29 = arith.cmpi sgt, %arg1, %c0_i32 : i32
    %30 = arith.extui %29 : i1 to i32
    %c0_i32_22 = arith.constant 0 : i32
    %31 = arith.cmpi ne, %30, %c0_i32_22 : i32
    scf.if %31 {
      %c0_31 = arith.constant 0 : index
      %c0_32 = arith.constant 0 : index
      %c0_33 = arith.constant 0 : index
      %c0_34 = arith.constant 0 : index
      %41 = vector.load %arg3[%c0_31, %c0_32, %c0_33, %c0_34] : memref<1x1x16x16xbf16, #tpu.memory_space<vmem>>, vector<1x1x16x16xbf16>
      %42 = vector.shape_cast %41 : vector<1x1x16x16xbf16> to vector<1x16x16xbf16>
      %cst_35 = arith.constant 0.000000e+00 : bf16
      %43 = vector.broadcast %cst_35 : bf16 to vector<1x1x16xbf16>
      %44 = vector.extract_strided_slice %42 {offsets = [0, 0, 0], sizes = [1, 15, 16], strides = [1, 1, 1]} : vector<1x16x16xbf16> to vector<1x15x16xbf16>
      %45 = tpu.concatenate %43, %44 in 1 : vector<1x1x16xbf16>, vector<1x15x16xbf16> -> vector<1x16x16xbf16>
      %46 = vector.extract_strided_slice %42 {offsets = [0, 1, 0], sizes = [1, 15, 16], strides = [1, 1, 1]} : vector<1x16x16xbf16> to vector<1x15x16xbf16>
      %47 = tpu.concatenate %46, %43 in 1 : vector<1x15x16xbf16>, vector<1x1x16xbf16> -> vector<1x16x16xbf16>
      %48 = tpu.concatenate %45, %42, %47 in 2 : vector<1x16x16xbf16>, vector<1x16x16xbf16>, vector<1x16x16xbf16> -> vector<1x16x48xbf16>
      %c0_36 = arith.constant 0 : index
      %c0_37 = arith.constant 0 : index
      %49 = vector.load %arg7[%c0_36, %c0_37] : memref<64x32xf32, #tpu.memory_space<vmem>>, vector<16x32xf32>
      %50 = vector.shape_cast %48 : vector<1x16x48xbf16> to vector<16x48xbf16>
      %c0_38 = arith.constant 0 : index
      %c0_39 = arith.constant 0 : index
      %c0_40 = arith.constant 0 : index
      %51 = vector.load %arg5[%c0_38, %c0_39, %c0_40] : memref<3x48x32xbf16, #tpu.memory_space<vmem>>, vector<1x48x32xbf16>
      %52 = vector.shape_cast %51 : vector<1x48x32xbf16> to vector<48x32xbf16>
      %cst_41 = arith.constant dense<0.000000e+00> : vector<16x32xf32>
      %53 = tpu.matmul %50, %52, %cst_41 {dimension_numbers = #tpu.dot_dimension_numbers<[1], [0], [0], [1], [0, 0, 1, 1], [], []>} : vector<16x48xbf16>, vector<48x32xbf16>, vector<16x32xf32> -> vector<16x32xf32>
      %54 = arith.addf %49, %53 : vector<16x32xf32>
      %c0_42 = arith.constant 0 : index
      %c0_43 = arith.constant 0 : index
      %55 = vector.load %arg7[%c0_42, %c0_43] : memref<64x32xf32, #tpu.memory_space<vmem>>, vector<16x32xf32>
      tpu.vector_store %arg7[%c0_42, %c0_43], %54 {strides = array<i32>} : memref<64x32xf32, #tpu.memory_space<vmem>>, vector<16x32xf32>,
    } else {
    }
    %c3_i32 = arith.constant 3 : i32
    %32 = arith.cmpi slt, %arg1, %c3_i32 : i32
    %33 = arith.extui %32 : i1 to i32
    %c0_i32_23 = arith.constant 0 : i32
    %34 = arith.cmpi ne, %33, %c0_i32_23 : i32
    scf.if %34 {
      %c0_31 = arith.constant 0 : index
      %c0_32 = arith.constant 0 : index
      %c0_33 = arith.constant 0 : index
      %c0_34 = arith.constant 0 : index
      %41 = vector.load %arg4[%c0_31, %c0_32, %c0_33, %c0_34] : memref<1x1x16x16xbf16, #tpu.memory_space<vmem>>, vector<1x1x16x16xbf16>
      %42 = vector.shape_cast %41 : vector<1x1x16x16xbf16> to vector<1x16x16xbf16>
      %cst_35 = arith.constant 0.000000e+00 : bf16
      %43 = vector.broadcast %cst_35 : bf16 to vector<1x1x16xbf16>
      %44 = vector.extract_strided_slice %42 {offsets = [0, 0, 0], sizes = [1, 15, 16], strides = [1, 1, 1]} : vector<1x16x16xbf16> to vector<1x15x16xbf16>
      %45 = tpu.concatenate %43, %44 in 1 : vector<1x1x16xbf16>, vector<1x15x16xbf16> -> vector<1x16x16xbf16>
      %46 = vector.extract_strided_slice %42 {offsets = [0, 1, 0], sizes = [1, 15, 16], strides = [1, 1, 1]} : vector<1x16x16xbf16> to vector<1x15x16xbf16>
      %47 = tpu.concatenate %46, %43 in 1 : vector<1x15x16xbf16>, vector<1x1x16xbf16> -> vector<1x16x16xbf16>
      %48 = tpu.concatenate %45, %42, %47 in 2 : vector<1x16x16xbf16>, vector<1x16x16xbf16>, vector<1x16x16xbf16> -> vector<1x16x48xbf16>
      %c48 = arith.constant 48 : index
      %c0_36 = arith.constant 0 : index
      %49 = vector.load %arg7[%c48, %c0_36] : memref<64x32xf32, #tpu.memory_space<vmem>>, vector<16x32xf32>
      %50 = vector.shape_cast %48 : vector<1x16x48xbf16> to vector<16x48xbf16>
      %c2_37 = arith.constant 2 : index
      %c0_38 = arith.constant 0 : index
      %c0_39 = arith.constant 0 : index
      %51 = vector.load %arg5[%c2_37, %c0_38, %c0_39] : memref<3x48x32xbf16, #tpu.memory_space<vmem>>, vector<1x48x32xbf16>
      %52 = vector.shape_cast %51 : vector<1x48x32xbf16> to vector<48x32xbf16>
      %cst_40 = arith.constant dense<0.000000e+00> : vector<16x32xf32>
      %53 = tpu.matmul %50, %52, %cst_40 {dimension_numbers = #tpu.dot_dimension_numbers<[1], [0], [0], [1], [0, 0, 1, 1], [], []>} : vector<16x48xbf16>, vector<48x32xbf16>, vector<16x32xf32> -> vector<16x32xf32>
      %54 = arith.addf %49, %53 : vector<16x32xf32>
      %c48_41 = arith.constant 48 : index
      %c0_42 = arith.constant 0 : index
      %55 = vector.load %arg7[%c48_41, %c0_42] : memref<64x32xf32, #tpu.memory_space<vmem>>, vector<16x32xf32>
      tpu.vector_store %arg7[%c48_41, %c0_42], %54 {strides = array<i32>} : memref<64x32xf32, #tpu.memory_space<vmem>>, vector<16x32xf32>,
    } else {
    }
    %c0_24 = arith.constant 0 : index
    %c0_25 = arith.constant 0 : index
    %35 = vector.load %arg7[%c0_24, %c0_25] : memref<64x32xf32, #tpu.memory_space<vmem>>, vector<64x32xf32>
    %cst_26 = arith.constant 0.000000e+00 : f32
    %36 = vector.broadcast %cst_26 : f32 to vector<64x32xf32>
    %37 = arith.maximumf %35, %36 : vector<64x32xf32>
    %38 = vector.shape_cast %37 : vector<64x32xf32> to vector<1x4x16x32xf32>
    %39 = arith.truncf %38 : vector<1x4x16x32xf32> to vector<1x4x16x32xbf16>
    %c0_27 = arith.constant 0 : index
    %c0_28 = arith.constant 0 : index
    %c0_29 = arith.constant 0 : index
    %c0_30 = arith.constant 0 : index
    %40 = vector.load %arg6[%c0_27, %c0_28, %c0_29, %c0_30] : memref<1x4x16x32xbf16, #tpu.memory_space<vmem>>, vector<1x4x16x32xbf16>
    tpu.vector_store %arg6[%c0_27, %c0_28, %c0_29, %c0_30], %39 {strides = array<i32>} : memref<1x4x16x32xbf16, #tpu.memory_space<vmem>>, vector<1x4x16x32xbf16>,
    return
  }
  func.func @transform_0(%arg0: i32, %arg1: i32) -> (i32, i32, i32, i32) {
    %c0_i32 = arith.constant 0 : i32
    %c0_i32_0 = arith.constant 0 : i32
    %c0_i32_1 = arith.constant 0 : i32
    return %arg0, %arg1, %c0_i32, %c0_i32_0 : i32, i32, i32, i32
  }
  func.func @transform_1(%arg0: i32, %arg1: i32) -> (i32, i32, i32, i32) {
    %c4_i32 = arith.constant 4 : i32
    %0 = arith.muli %arg1, %c4_i32 : i32
    %c1_i32 = arith.constant 1 : i32
    %1 = arith.subi %0, %c1_i32 : i32
    %c0_i32 = arith.constant 0 : i32
    %2 = arith.maxsi %1, %c0_i32 : i32
    %c0_i32_0 = arith.constant 0 : i32
    %c0_i32_1 = arith.constant 0 : i32
    %c0_i32_2 = arith.constant 0 : i32
    return %arg0, %2, %c0_i32_0, %c0_i32_1 : i32, i32, i32, i32
  }
  func.func @transform_2(%arg0: i32, %arg1: i32) -> (i32, i32, i32, i32) {
    %c1_i32 = arith.constant 1 : i32
    %0 = arith.addi %arg1, %c1_i32 : i32
    %c4_i32 = arith.constant 4 : i32
    %1 = arith.muli %0, %c4_i32 : i32
    %c15_i32 = arith.constant 15 : i32
    %2 = arith.minsi %1, %c15_i32 : i32
    %c0_i32 = arith.constant 0 : i32
    %c0_i32_0 = arith.constant 0 : i32
    %c0_i32_1 = arith.constant 0 : i32
    return %arg0, %2, %c0_i32, %c0_i32_0 : i32, i32, i32, i32
  }
  func.func @transform_3(%arg0: i32, %arg1: i32) -> (i32, i32, i32) {
    %c0_i32 = arith.constant 0 : i32
    %c0_i32_0 = arith.constant 0 : i32
    %c0_i32_1 = arith.constant 0 : i32
    %c0_i32_2 = arith.constant 0 : i32
    return %c0_i32, %c0_i32_0, %c0_i32_1 : i32, i32, i32
  }
  func.func @transform_4(%arg0: i32, %arg1: i32) -> (i32, i32, i32, i32) {
    %c0_i32 = arith.constant 0 : i32
    %c0_i32_0 = arith.constant 0 : i32
    %c0_i32_1 = arith.constant 0 : i32
    return %arg0, %arg1, %c0_i32, %c0_i32_0 : i32, i32, i32, i32
  }
}

</mosaic_0001>

<llo_original>
// kernel: tpu_custom_call.1
$region0: #{tpu_custom_call.1}
  #allocation0 [shape = 'u32[]', space=smem, size = 0x4, offset = 0x4, fixed_abs, tag = 'smem constant byte address 0x4 - core index']
  #allocation1 [shape = 'u32[144,128]{1,0:T(1,128)}', space=vmem, size = 0x12000, scoped, tag = 'internal scratch']
  #allocation2 [shape = 'f32[64,32]{1,0:T(8,128)}', space=vmem, size = 0x8000, scoped, tag = 'scratch operand']
  %s0 = inlined_call_operand.hbm [shape: bf16[2,16,16,16], index: 0, kind: input, shape index: {}]
  %s1 = inlined_call_operand.hbm [shape: bf16[2,16,16,16], index: 1, kind: input, shape index: {}]
  %s2 = inlined_call_operand.hbm [shape: bf16[2,16,16,16], index: 2, kind: input, shape index: {}]
  %s3 = inlined_call_operand.vmem [shape: bf16[3,48,32], index: 3, kind: input, shape index: {}]
  %s4 = inlined_call_operand.hbm [shape: bf16[2,16,16,32], index: 4, kind: output, shape index: {}]
  %s5 = sld [smem:[#allocation0]]
  $region69: #{tpu_custom_call.1} parent=0
    _
  %s7 = ssub.s32 1, %s5
  %s8 = scalar_select 0, %s7, %s5
  $region1: #{tpu_custom_call.1} parent=0
    #allocation3 [shape = 'u8[32768]{0}', space=vmem, size = 0x8000, scoped, tag = 'input window, operand 0']
    #allocation4 [shape = 's32[2]{0}', space=sflag, size = 0x8, scoped, tag = 'scoped memory for tpu_custom_call.1']
    #allocation5 [shape = 's32[2]{0}', space=sflag, size = 0x8, scoped, tag = 'scoped memory for tpu_custom_call.1']
    #allocation6 [shape = 'u8[8192]{0}', space=vmem, size = 0x2000, scoped, tag = 'input window, operand 1']
    #allocation7 [shape = 's32[2]{0}', space=sflag, size = 0x8, scoped, tag = 'scoped memory for tpu_custom_call.1']
    #allocation8 [shape = 'u8[8192]{0}', space=vmem, size = 0x2000, scoped, tag = 'input window, operand 2']
    #allocation9 [shape = 'u8[32768]{0}', space=vmem, size = 0x8000, scoped, tag = 'output window, operand 0']
    %9 = vsyncpa [#allocation4], 0
    %s10 = scalar_lea.sflag [#allocation4], 1
    %11 = vsyncpa %s10, 0
    %12 = vsyncpa [#allocation7], 0
    %s13 = scalar_lea.sflag [#allocation7], 1
    %14 = vsyncpa %s13, 0
    %15 = vsyncpa [#allocation5], 0
    %s16 = scalar_lea.sflag [#allocation5], 1
    %17 = vsyncpa %s16, 0
    loop: start=0, step=1, limit=10
    $region2: #{tpu_custom_call.1} parent=1 // loop_pre_header
      _
    $region3: #{tpu_custom_call.1} parent=1 // loop_header
      %s19 = sphi 0, %s23
      %p20 = scmp.ge.s32.totalorder %s19, 10
      %s26 = sphi 0, %s38
      %s27 = sphi 0, %s34
      %s28 = sphi 0, %s26
      %s29 = sphi 0, %s27
      %s30 = sphi 0, %s28
      %s31 = sphi 0, %s29
      %s43 = sphi 0, %s45
      %s46 = sphi 0, %s43
      %s47 = sphi 0, %s46
      %s63 = sphi 0, %s47
      %s79 = sphi 0, %s81
      %s82 = sphi 0, %s79
      %s83 = sphi 0, %s82
      %s99 = sphi 0, %s83
      %s115 = sphi 0, %s117
      %s118 = sphi 0, %s115
      %s119 = sphi 0, %s118
      %s135 = sphi 0, %s119
      %s139 = sphi 0, %s139
      %s141 = sphi 0, %s139
      %s142 = sphi 0, %s141
      %s156 = sphi 0, %s142
      %s164 = sphi 0, %s166
      %s167 = sphi 0, %s164
      %s168 = sphi 0, %s167
      %s184 = sphi 0, %s168
    $region4: #{tpu_custom_call.1} parent=1 // loop_header_branch
      %22 = sbr.rel (%p20) target = $region8
    $region5: #{tpu_custom_call.1} parent=1 // loop_body
      %s24 = ssub.s32 %s19, 1
      %s25 = ssub.s32 %s19, 2
      %s32 = sadd.s32 1, %s27
      %p33 = scmp.ge.s32.totalorder %s32, 4
      %s34 = scalar_select %p33, 0, %s32
      %s35 = sadd.s32 1, %s26
      %s36 = scalar_select %p33, %s35, %s26
      %p37 = scmp.ge.s32.totalorder %s36, 2
      %s38 = scalar_select %p37, 0, %s36
      %s39 = ssub.s32 %s26, %s38
      %s40 = ssub.s32 %s27, %s34
      %s41 = sor.u32 %s39, %s40
      %p42 = scmp.eq.s32.totalorder %s41, 0
      %s44 = sadd.s32 %s43, 1
      %s45 = scalar_select %p42, %s43, %s44
      %p48 = pneg %p42
      %p49 = scmp.eq.s32.totalorder %s19, 7
      %p50 = por %p48, %p49
      %p51 = scmp.ne.s32.totalorder %s43, %s46
      %p52 = scmp.eq.s32.totalorder %s19, 0
      %p53 = por %p51, %p52
      %p54 = scmp.ne.s32.totalorder %s43, %s46
      %p55 = scmp.eq.s32.totalorder %s24, 7
      %p56 = por %p54, %p55
      %p57 = scmp.ne.s32.totalorder %s46, %s47
      %p58 = scmp.eq.s32.totalorder %s24, 0
      %p59 = por %p57, %p58
      %p60 = scmp.ne.s32.totalorder %s46, %s47
      %p61 = scmp.eq.s32.totalorder %s25, 7
      %p62 = por %p60, %p61
      %p64 = scmp.ne.s32.totalorder %s47, %s63
      %p65 = scmp.eq.s32.totalorder %s25, 0
      %p66 = por %p64, %p65
      %s67 = smul.u32 %s27, 4
      %s68 = ssub.s32 %s67, 1
      %p69 = scmp.gt.s32.totalorder %s68, 0
      %s70 = scalar_select %p69, %s68, 0
      %s71 = smul.u32 %s34, 4
      %s72 = ssub.s32 %s71, 1
      %p73 = scmp.gt.s32.totalorder %s72, 0
      %s74 = scalar_select %p73, %s72, 0
      %s75 = ssub.s32 %s26, %s38
      %s76 = ssub.s32 %s70, %s74
      %s77 = sor.u32 %s75, %s76
      %p78 = scmp.eq.s32.totalorder %s77, 0
      %s80 = sadd.s32 %s79, 1
      %s81 = scalar_select %p78, %s79, %s80
      %p84 = pneg %p78
      %p85 = scmp.eq.s32.totalorder %s19, 7
      %p86 = por %p84, %p85
      %p87 = scmp.ne.s32.totalorder %s79, %s82
      %p88 = scmp.eq.s32.totalorder %s19, 0
      %p89 = por %p87, %p88
      %p90 = scmp.ne.s32.totalorder %s79, %s82
      %p91 = scmp.eq.s32.totalorder %s24, 7
      %p92 = por %p90, %p91
      %p93 = scmp.ne.s32.totalorder %s82, %s83
      %p94 = scmp.eq.s32.totalorder %s24, 0
      %p95 = por %p93, %p94
      %p96 = scmp.ne.s32.totalorder %s82, %s83
      %p97 = scmp.eq.s32.totalorder %s25, 7
      %p98 = por %p96, %p97
      %p100 = scmp.ne.s32.totalorder %s83, %s99
      %p101 = scmp.eq.s32.totalorder %s25, 0
      %p102 = por %p100, %p101
      %s103 = sadd.s32 %s27, 1
      %s104 = smul.u32 %s103, 4
      %p105 = scmp.lt.s32.totalorder %s104, 15
      %s106 = scalar_select %p105, %s104, 15
      %s107 = sadd.s32 %s34, 1
      %s108 = smul.u32 %s107, 4
      %p109 = scmp.lt.s32.totalorder %s108, 15
      %s110 = scalar_select %p109, %s108, 15
      %s111 = ssub.s32 %s26, %s38
      %s112 = ssub.s32 %s106, %s110
      %s113 = sor.u32 %s111, %s112
      %p114 = scmp.eq.s32.totalorder %s113, 0
      %s116 = sadd.s32 %s115, 1
      %s117 = scalar_select %p114, %s115, %s116
      %p120 = pneg %p114
      %p121 = scmp.eq.s32.totalorder %s19, 7
      %p122 = por %p120, %p121
      %p123 = scmp.ne.s32.totalorder %s115, %s118
      %p124 = scmp.eq.s32.totalorder %s19, 0
      %p125 = por %p123, %p124
      %p126 = scmp.ne.s32.totalorder %s115, %s118
      %p127 = scmp.eq.s32.totalorder %s24, 7
      %p128 = por %p126, %p127
      %p129 = scmp.ne.s32.totalorder %s118, %s119
      %p130 = scmp.eq.s32.totalorder %s24, 0
      %p131 = por %p129, %p130
      %p132 = scmp.ne.s32.totalorder %s118, %s119
      %p133 = scmp.eq.s32.totalorder %s25, 7
      %p134 = por %p132, %p133
      %p136 = scmp.ne.s32.totalorder %s119, %s135
      %p137 = scmp.eq.s32.totalorder %s25, 0
      %p138 = por %p136, %p137
      %s140 = sadd.s32 %s139, 1
      %p143 = scmp.eq.s32.totalorder %s19, 7
      %p144 = scmp.ne.s32.totalorder %s139, %s141
      %p145 = scmp.eq.s32.totalorder %s19, 0
      %p146 = por %p144, %p145
      %p147 = scmp.ne.s32.totalorder %s139, %s141
      %p148 = scmp.eq.s32.totalorder %s24, 7
      %p149 = por %p147, %p148
      %p150 = scmp.ne.s32.totalorder %s141, %s142
      %p151 = scmp.eq.s32.totalorder %s24, 0
      %p152 = por %p150, %p151
      %p153 = scmp.ne.s32.totalorder %s141, %s142
      %p154 = scmp.eq.s32.totalorder %s25, 7
      %p155 = por %p153, %p154
      %p157 = scmp.ne.s32.totalorder %s142, %s156
      %p158 = scmp.eq.s32.totalorder %s25, 0
      %p159 = por %p157, %p158
      %s160 = ssub.s32 %s26, %s38
      %s161 = ssub.s32 %s27, %s34
      %s162 = sor.u32 %s160, %s161
      %p163 = scmp.eq.s32.totalorder %s162, 0
      %s165 = sadd.s32 %s164, 1
      %s166 = scalar_select %p163, %s164, %s165
      %p169 = pneg %p163
      %p170 = scmp.eq.s32.totalorder %s19, 7
      %p171 = por %p169, %p170
      %p172 = scmp.ne.s32.totalorder %s164, %s167
      %p173 = scmp.eq.s32.totalorder %s19, 0
      %p174 = por %p172, %p173
      %p175 = scmp.ne.s32.totalorder %s164, %s167
      %p176 = scmp.eq.s32.totalorder %s24, 7
      %p177 = por %p175, %p176
      %p178 = scmp.ne.s32.totalorder %s167, %s168
      %p179 = scmp.eq.s32.totalorder %s24, 0
      %p180 = por %p178, %p179
      %p181 = scmp.ne.s32.totalorder %s167, %s168
      %p182 = scmp.eq.s32.totalorder %s25, 7
      %p183 = por %p181, %p182
      %p185 = scmp.ne.s32.totalorder %s168, %s184
      %p186 = scmp.eq.s32.totalorder %s25, 0
      %p187 = por %p185, %p186
      %p188 = scmp.le.s32.totalorder 1, %s19
      %p189 = scmp.lt.s32.totalorder %s19, 9
      %p190 = pnand %p188, %p189
      %p191 = pneg %p190
      // Predicated region
      $region9: #{tpu_custom_call.1} parent=5 // pred_check
        _
      $region10: #{tpu_custom_call.1} parent=5 // pred_check_branch
        %193 = sbr.rel (%p190) target = $region12
      $region11: #{tpu_custom_call.1} parent=5 // pred_region
        %s194 = ssub.s32 %s19, 1
        // Predicated region
        $region13: #{tpu_custom_call.1} parent=11 // pred_check
          %p195 = pneg %p152
        $region14: #{tpu_custom_call.1} parent=11 // pred_check_branch
          %197 = sbr.rel (%p195) target = $region16
        $region15: #{tpu_custom_call.1} parent=11 // pred_region
          _
        $region16: #{tpu_custom_call.1} parent=11 // pred_fallthru
          _
      $region12: #{tpu_custom_call.1} parent=5 // pred_fallthru
        _
      %p198 = scmp.lt.s32.totalorder %s19, 8
      // Predicated region
      $region17: #{tpu_custom_call.1} parent=5 // pred_check
        %p199 = pneg %p198
      $region18: #{tpu_custom_call.1} parent=5 // pred_check_branch
        %201 = sbr.rel (%p199) target = $region20
      $region19: #{tpu_custom_call.1} parent=5 // pred_region
        // Predicated region
        $region21: #{tpu_custom_call.1} parent=19 // pred_check
          %p202 = pneg %p53
        $region22: #{tpu_custom_call.1} parent=19 // pred_check_branch
          %204 = sbr.rel (%p202) target = $region24
        $region23: #{tpu_custom_call.1} parent=19 // pred_region
          %s205 = sand.u32 %s43, 1
          %s206 = scalar_lea.sflag [#allocation4], %s205
          %s207 = sand.u32 %s43, 1
          %s208 = smul.addr %s207, 32
          %s209 = scalar_lea.vmem [#allocation3], %s208
          %s210 = smul.u32 4, %s27
          %s212 = ssub.s32 512, 512
          %213 = vsyncadd %s206, %s212
          %s214 = smul.addr %s210, 2
          %s215 = smul.addr %s26, 32
          %s216 = sadd.s32 %s214, %s215
          %s217 = smul.addr %s216, 64
          %s218 = scalar_lea.hbm %s0, %s217
          %s219 = sshll.u32 %s209, 4
          %s220 = int_to_ptr.vmem [resolvable:$true] %s219
          %225 = dma.hbm_to_vmem [thread:$0]  %s218, 512, %s220, %s206, 64, 64, 4
        $region24: #{tpu_custom_call.1} parent=19 // pred_fallthru
          _
        // Predicated region
        $region25: #{tpu_custom_call.1} parent=19 // pred_check
          %p226 = pneg %p89
        $region26: #{tpu_custom_call.1} parent=19 // pred_check_branch
          %228 = sbr.rel (%p226) target = $region28
        $region27: #{tpu_custom_call.1} parent=19 // pred_region
          %s229 = sand.u32 %s19, 1
          %s230 = scalar_lea.sflag [#allocation7], %s229
          %s231 = sand.u32 %s79, 1
          %s232 = smul.addr %s231, 8
          %s233 = scalar_lea.vmem [#allocation6], %s232
          %s234 = smul.u32 %s27, 4
          %s235 = ssub.s32 %s234, 1
          %p236 = scmp.gt.s32.totalorder %s235, 0
          %s237 = scalar_select %p236, %s235, 0
          %s239 = ssub.s32 128, 128
          %240 = vsyncadd %s230, %s239
          %s241 = smul.addr %s237, 2
          %s242 = smul.addr %s26, 32
          %s243 = sadd.s32 %s241, %s242
          %s244 = smul.addr %s243, 64
          %s245 = scalar_lea.hbm %s1, %s244
          %s246 = sshll.u32 %s233, 4
          %s247 = int_to_ptr.vmem [resolvable:$true] %s246
          %252 = dma.hbm_to_vmem [thread:$0]  %s245, 128, %s247, %s230, 64, 64, 4
        $region28: #{tpu_custom_call.1} parent=19 // pred_fallthru
          _
        // Predicated region
        $region29: #{tpu_custom_call.1} parent=19 // pred_check
          %p253 = pneg %p125
        $region30: #{tpu_custom_call.1} parent=19 // pred_check_branch
          %255 = sbr.rel (%p253) target = $region32
        $region31: #{tpu_custom_call.1} parent=19 // pred_region
          %s256 = sand.u32 %s19, 1
          %s257 = scalar_lea.sflag [#allocation7], %s256
          %s258 = sand.u32 %s115, 1
          %s259 = smul.addr %s258, 8
          %s260 = scalar_lea.vmem [#allocation8], %s259
          %s261 = sadd.s32 %s27, 1
          %s262 = smul.u32 %s261, 4
          %p263 = scmp.lt.s32.totalorder %s262, 15
          %s264 = scalar_select %p263, %s262, 15
          %s266 = ssub.s32 128, 128
          %267 = vsyncadd %s257, %s266
          %s268 = smul.addr %s264, 2
          %s269 = smul.addr %s26, 32
          %s270 = sadd.s32 %s268, %s269
          %s271 = smul.addr %s270, 64
          %s272 = scalar_lea.hbm %s2, %s271
          %s273 = sshll.u32 %s260, 4
          %s274 = int_to_ptr.vmem [resolvable:$true] %s273
          %279 = dma.hbm_to_vmem [thread:$0]  %s272, 128, %s274, %s257, 64, 64, 4
        $region32: #{tpu_custom_call.1} parent=19 // pred_fallthru
          _
      $region20: #{tpu_custom_call.1} parent=5 // pred_fallthru
        _
      %p280 = scmp.le.s32.totalorder 1, %s19
      %p281 = scmp.lt.s32.totalorder %s19, 9
      %p282 = pnand %p280, %p281
      %p283 = pneg %p282
      // Predicated region
      $region33: #{tpu_custom_call.1} parent=5 // pred_check
        _
      $region34: #{tpu_custom_call.1} parent=5 // pred_check_branch
        %285 = sbr.rel (%p282) target = $region36
      $region35: #{tpu_custom_call.1} parent=5 // pred_region
        %s286 = ssub.s32 %s19, 1
        %s287 = sand.u32 %s46, 1
        %s288 = scalar_lea.sflag [#allocation4], %s287
        %s289 = sand.u32 %s46, 1
        %s290 = smul.addr %s289, 32
        %s291 = scalar_lea.vmem [#allocation3], %s290
        // Predicated region
        $region37: #{tpu_custom_call.1} parent=35 // pred_check
          %p292 = pneg %p59
        $region38: #{tpu_custom_call.1} parent=35 // pred_check_branch
          %294 = sbr.rel (%p292) target = $region40
        $region39: #{tpu_custom_call.1} parent=35 // pred_region
          %295 = dma.done %s288, 512
        $region40: #{tpu_custom_call.1} parent=35 // pred_fallthru
          _
        %s296 = sand.u32 %s24, 1
        %s297 = scalar_lea.sflag [#allocation7], %s296
        %s298 = sand.u32 %s82, 1
        %s299 = smul.addr %s298, 8
        %s300 = scalar_lea.vmem [#allocation6], %s299
        // Predicated region
        $region41: #{tpu_custom_call.1} parent=35 // pred_check
          %p301 = pneg %p95
        $region42: #{tpu_custom_call.1} parent=35 // pred_check_branch
          %303 = sbr.rel (%p301) target = $region44
        $region43: #{tpu_custom_call.1} parent=35 // pred_region
          %304 = dma.done %s297, 128
        $region44: #{tpu_custom_call.1} parent=35 // pred_fallthru
          _
        %s305 = sand.u32 %s24, 1
        %s306 = scalar_lea.sflag [#allocation7], %s305
        %s307 = sand.u32 %s118, 1
        %s308 = smul.addr %s307, 8
        %s309 = scalar_lea.vmem [#allocation8], %s308
        // Predicated region
        $region45: #{tpu_custom_call.1} parent=35 // pred_check
          %p310 = pneg %p131
        $region46: #{tpu_custom_call.1} parent=35 // pred_check_branch
          %312 = sbr.rel (%p310) target = $region48
        $region47: #{tpu_custom_call.1} parent=35 // pred_region
          %313 = dma.done %s306, 128
        $region48: #{tpu_custom_call.1} parent=35 // pred_fallthru
          _
        %s314 = sand.u32 %s46, 1
        %s315 = scalar_lea.sflag [#allocation4], %s314
        %s316 = sand.u32 %s46, 1
        %s317 = smul.addr %s316, 32
        %s318 = scalar_lea.vmem [#allocation3], %s317
        %p319 = pneg %p59
        %p320 = pneg %p56
        %s321 = sand.u32 %s24, 1
        %s322 = scalar_lea.sflag [#allocation7], %s321
        %s323 = sand.u32 %s82, 1
        %s324 = smul.addr %s323, 8
        %s325 = scalar_lea.vmem [#allocation6], %s324
        %p326 = pneg %p95
        %p327 = pneg %p92
        %s328 = sand.u32 %s24, 1
        %s329 = scalar_lea.sflag [#allocation7], %s328
        %s330 = sand.u32 %s118, 1
        %s331 = smul.addr %s330, 8
        %s332 = scalar_lea.vmem [#allocation8], %s331
        %p333 = pneg %p131
        %p334 = pneg %p128
        %p335 = pneg %p152
        %p336 = pneg %p149
        %p337 = pneg %p180
        %p338 = pneg %p177
        %s339 = sand.u32 %s167, 1
        %s340 = scalar_lea.sflag [#allocation5], %s339
        %s341 = sand.u32 %s167, 1
        %s342 = smul.addr %s341, 32
        %s343 = scalar_lea.vmem [#allocation9], %s342
        %s344 = smul.u32 4, %s29
        %s345 = smul.u32 %s29, 4
        %s346 = ssub.s32 %s345, 1
        %p347 = scmp.gt.s32.totalorder %s346, 0
        %s348 = scalar_select %p347, %s346, 0
        %s349 = sadd.s32 %s29, 1
        %s350 = smul.u32 %s349, 4
        %p351 = scmp.lt.s32.totalorder %s350, 15
        %s352 = scalar_select %p351, %s350, 15
        %s353 = smul.u32 4, %s29
        %v355 = vld [vmem:[%s291] sm:$0xf]
        %v356 = vld [vmem:[%s291 + $0x4] sm:$0xf]
        %v357 = vld [vmem:[%s291 + $0x8] sm:$0xf]
        %v358 = vld [vmem:[%s291 + $0xc] sm:$0xf]
        %v359 = vld [vmem:[%s291 + $0x10] sm:$0xf]
        %v360 = vld [vmem:[%s291 + $0x14] sm:$0xf]
        %v361 = vld [vmem:[%s291 + $0x18] sm:$0xf]
        %v362 = vld [vmem:[%s291 + $0x1c] sm:$0xf]
        %v371 = vunpack.c.l.b16 %v355
        %v372 = vunpack.c.l.b16 %v356
        %v373 = vunpack.c.l.b16 %v357
        %v374 = vunpack.c.l.b16 %v358
        %v375 = vunpack.c.l.b16 %v359
        %v376 = vunpack.c.l.b16 %v360
        %v377 = vunpack.c.l.b16 %v361
        %v378 = vunpack.c.l.b16 %v362
        %v379 = vpack.c.b16 %v372, %v371
        %v380 = vpack.c.b16 %v374, %v373
        %v381 = vpack.c.b16 %v376, %v375
        %v382 = vpack.c.b16 %v378, %v377
        %v384 = vshrl.u32 %v379, 16
        %v386 = vrot.slane %v384, 7
        %v387 = vshll.u32 %v379, 16
        %v389 = vor.u32 %v386, %v387
        %v391 = vshrl.u32 %v380, 16
        %v393 = vrot.slane %v391, 7
        %v394 = vshll.u32 %v380, 16
        %v396 = vor.u32 %v393, %v394
        %v398 = vshrl.u32 %v381, 16
        %v400 = vrot.slane %v398, 7
        %v401 = vshll.u32 %v381, 16
        %v403 = vor.u32 %v400, %v401
        %v405 = vshrl.u32 %v382, 16
        %v407 = vrot.slane %v405, 7
        %v408 = vshll.u32 %v382, 16
        %v410 = vor.u32 %v407, %v408
        %vm415 = vcmask 1040384
        %vm416 = vsmask.f32 256
        %vm417 = vmand %vm415, %vm416
        %v418 = vsel %vm417, 0, %v389
        %v419 = vsel %vm417, 0, %v396
        %v420 = vsel %vm417, 0, %v403
        %v421 = vsel %vm417, 0, %v410
        %v422 = vrot.slane %v387, 1
        %v423 = vor.u32 %v384, %v422
        %v424 = vrot.slane %v394, 1
        %v425 = vor.u32 %v391, %v424
        %v426 = vrot.slane %v401, 1
        %v427 = vor.u32 %v398, %v426
        %v428 = vrot.slane %v408, 1
        %v429 = vor.u32 %v405, %v428
        %vm434 = vcmask 1047552
        %vm435 = vsmask.f32 7424
        %vm436 = vmand %vm434, %vm435
        %v437 = vsel %vm436, %v423, 0
        %v438 = vsel %vm436, %v425, 0
        %v439 = vsel %vm436, %v427, 0
        %v440 = vsel %vm436, %v429, 0
        %441 = vrot.lane.b32.xlu0 %v379, 16
        %v442 = vpop.permute.xlu0 %441
        %443 = vrot.lane.b32.xlu0 %v380, 16
        %v444 = vpop.permute.xlu0 %443
        %445 = vrot.lane.b32.xlu0 %v381, 16
        %v446 = vpop.permute.xlu0 %445
        %447 = vrot.lane.b32.xlu0 %v382, 16
        %v448 = vpop.permute.xlu0 %447
        %453 = vrot.lane.b32.xlu0 %v437, 32
        %v454 = vpop.permute.xlu0 %453
        %455 = vrot.lane.b32.xlu0 %v438, 32
        %v456 = vpop.permute.xlu0 %455
        %457 = vrot.lane.b32.xlu0 %v439, 32
        %v458 = vpop.permute.xlu0 %457
        %459 = vrot.lane.b32.xlu0 %v440, 32
        %v460 = vpop.permute.xlu0 %459
        %vm461 = vcmask 130048
        %v464 = vsel %vm461, %v418, %v442
        %v467 = vsel %vm461, %v419, %v444
        %v470 = vsel %vm461, %v420, %v446
        %v473 = vsel %vm461, %v421, %v448
        %vm474 = vcmask 261120
        %v476 = vsel %vm474, %v464, %v454
        %v478 = vsel %vm474, %v467, %v456
        %v480 = vsel %vm474, %v470, %v458
        %v482 = vsel %vm474, %v473, %v460
        %s483 = scalar_lea.vmem %s3, 24
        %v484 = vld [vmem:[%s483] sm:$0xf]
        %v485 = vld [vmem:[%s483 + $0x4] sm:$0xf]
        %v486 = vld [vmem:[%s483 + $0x8] sm:$0xf]
        %v487 = vld [vmem:[%s483 + $0xc] sm:$0xf]
        %v488 = vld [vmem:[%s483 + $0x10] sm:$0xf]
        %v489 = vld [vmem:[%s483 + $0x14] sm:$0xf]
        %v496 = vunpack.c.l.b16 %v484
        %v497 = vunpack.c.l.b16 %v485
        %v498 = vunpack.c.l.b16 %v486
        %v499 = vunpack.c.l.b16 %v487
        %v500 = vunpack.c.l.b16 %v488
        %v501 = vunpack.c.l.b16 %v489
        %v502 = vpack.c.b16 %v497, %v496
        %v503 = vpack.c.b16 %v499, %v498
        %v504 = vpack.c.b16 %v501, %v500
        %vm508 = vcmask 392192
        %v509 = vsel %vm508, %v476, 0
        %v511 = vsel %vm508, %v478, 0
        %v513 = vsel %vm508, %v480, 0
        %v515 = vsel %vm508, %v482, 0
        %517 = vmatprep.subr.bf16.mxu0 0
        %518 = vmatpush1.bf16.msra.mxu0 %v502
        %519 = vmatprep.subr.bf16.mxu0 0
        %520 = vmatpush1.bf16.msra.mxu0 %v503
        %521 = vmatprep.subr.bf16.mxu0 0
        %522 = vmatpush1.bf16.msra.mxu0 %v504
        %523 = vmatprep.subr.bf16.mxu0 0
        %524 = vmatpush1.bf16.msra.mxu0 0
        %525 = vmatprep.subr.bf16.mxu0 0
        %526 = vmatpush1.bf16.msra.mxu0 0
        %527 = vmatprep.subr.bf16.mxu0 0
        %528 = vmatpush1.bf16.msra.mxu0 0
        %529 = vmatprep.subr.bf16.mxu0 0
        %530 = vmatpush1.bf16.msra.mxu0 0
        %531 = vmatprep.subr.bf16.mxu0 0
        %532 = vmatpush1.bf16.msra.mxu0 0
        %533 = vmatprep.subr.bf16.mxu0 0
        %534 = vmatpush1.bf16.msra.mxu0 0
        %535 = vmatprep.subr.bf16.mxu0 0
        %536 = vmatpush1.bf16.msra.mxu0 0
        %537 = vmatprep.subr.bf16.mxu0 0
        %538 = vmatpush1.bf16.msra.mxu0 0
        %539 = vmatprep.subr.bf16.mxu0 0
        %540 = vmatpush1.bf16.msra.mxu0 0
        %541 = vmatprep.subr.bf16.mxu0 0
        %542 = vmatpush1.bf16.msra.mxu0 0
        %543 = vmatprep.subr.bf16.mxu0 0
        %544 = vmatpush1.bf16.msra.mxu0 0
        %545 = vmatprep.subr.bf16.mxu0 0
        %546 = vmatpush1.bf16.msra.mxu0 0
        %547 = vmatprep.subr.bf16.mxu0 0
        %548 = vmatpush1.bf16.msra.mxu0 0
        %549 = vmatprep.mubr.bf16.mxu0 0
        %550 = vmatmul.mubr.bf16.gmra.mrb[0].mxu0 %v509
        %v551 = vpop.f32.mrb[0].mxu0
        %v552 = vadd.f32 0.0, %v551
        %v553 = vpop.f32.mrb[0].mxu0
        %v554 = vpop.f32.mrb[0].mxu0
        %v555 = vadd.f32 0.0, %v554
        %v556 = vpop.f32.mrb[0].mxu0
        %557 = vmatprep.mubr.bf16.mxu0 0
        %558 = vmatmul.mubr.bf16.gmra.mrb[0].mxu0 %v511
        %v559 = vpop.f32.mrb[0].mxu0
        %v560 = vadd.f32 0.0, %v559
        %v561 = vpop.f32.mrb[0].mxu0
        %v562 = vpop.f32.mrb[0].mxu0
        %v563 = vadd.f32 0.0, %v562
        %v564 = vpop.f32.mrb[0].mxu0
        %565 = vmatprep.mubr.bf16.mxu0 0
        %566 = vmatmul.mubr.bf16.gmra.mrb[0].mxu0 %v513
        %v567 = vpop.f32.mrb[0].mxu0
        %v568 = vadd.f32 0.0, %v567
        %v569 = vpop.f32.mrb[0].mxu0
        %v570 = vpop.f32.mrb[0].mxu0
        %v571 = vadd.f32 0.0, %v570
        %v572 = vpop.f32.mrb[0].mxu0
        %573 = vmatprep.mubr.bf16.mxu0 0
        %574 = vmatmul.mubr.bf16.gmra.mrb[0].mxu0 %v515
        %v575 = vpop.f32.mrb[0].mxu0
        %v576 = vadd.f32 0.0, %v575
        %v577 = vpop.f32.mrb[0].mxu0
        %v578 = vpop.f32.mrb[0].mxu0
        %v579 = vadd.f32 0.0, %v578
        %v580 = vpop.f32.mrb[0].mxu0
        %581 = vdwg.mxu0
        %582 = vst.msk [vmem:[#allocation2] sm:$0xff] %vm474, %v552
        %583 = vst.msk [vmem:[#allocation2 + $0x8] sm:$0xff] %vm474, %v555
        %584 = vst.msk [vmem:[#allocation2 + $0x10] sm:$0xff] %vm474, %v560
        %585 = vst.msk [vmem:[#allocation2 + $0x18] sm:$0xff] %vm474, %v563
        %586 = vst.msk [vmem:[#allocation2 + $0x20] sm:$0xff] %vm474, %v568
        %587 = vst.msk [vmem:[#allocation2 + $0x28] sm:$0xff] %vm474, %v571
        %588 = vst.msk [vmem:[#allocation2 + $0x30] sm:$0xff] %vm474, %v576
        %589 = vst.msk [vmem:[#allocation2 + $0x38] sm:$0xff] %vm474, %v579
        %v590 = vld [vmem:[#allocation2 + $0x10] sm:$0xff]
        %v591 = vld [vmem:[#allocation2 + $0x18] sm:$0xff]
        %v592 = vld [vmem:[#allocation2 + $0x20] sm:$0xff]
        %v593 = vld [vmem:[#allocation2 + $0x28] sm:$0xff]
        %v594 = vld [vmem:[#allocation2 + $0x30] sm:$0xff]
        %v595 = vld [vmem:[#allocation2 + $0x38] sm:$0xff]
        %v596 = vld [vmem:[%s3] sm:$0xf]
        %v597 = vld [vmem:[%s3 + $0x4] sm:$0xf]
        %v598 = vld [vmem:[%s3 + $0x8] sm:$0xf]
        %v599 = vld [vmem:[%s3 + $0xc] sm:$0xf]
        %v600 = vld [vmem:[%s3 + $0x10] sm:$0xf]
        %v601 = vld [vmem:[%s3 + $0x14] sm:$0xf]
        %v608 = vunpack.c.l.b16 %v596
        %v609 = vunpack.c.l.b16 %v597
        %v610 = vunpack.c.l.b16 %v598
        %v611 = vunpack.c.l.b16 %v599
        %v612 = vunpack.c.l.b16 %v600
        %v613 = vunpack.c.l.b16 %v601
        %v614 = vpack.c.b16 %v609, %v608
        %v615 = vpack.c.b16 %v611, %v610
        %v616 = vpack.c.b16 %v613, %v612
        %620 = vmatprep.subr.bf16.mxu0 0
        %621 = vmatpush1.bf16.msra.mxu0 %v614
        %622 = vmatprep.subr.bf16.mxu0 0
        %623 = vmatpush1.bf16.msra.mxu0 %v615
        %624 = vmatprep.subr.bf16.mxu0 0
        %625 = vmatpush1.bf16.msra.mxu0 %v616
        %626 = vmatprep.subr.bf16.mxu0 0
        %627 = vmatpush1.bf16.msra.mxu0 0
        %628 = vmatprep.subr.bf16.mxu0 0
        %629 = vmatpush1.bf16.msra.mxu0 0
        %630 = vmatprep.subr.bf16.mxu0 0
        %631 = vmatpush1.bf16.msra.mxu0 0
        %632 = vmatprep.subr.bf16.mxu0 0
        %633 = vmatpush1.bf16.msra.mxu0 0
        %634 = vmatprep.subr.bf16.mxu0 0
        %635 = vmatpush1.bf16.msra.mxu0 0
        %636 = vmatprep.subr.bf16.mxu0 0
        %637 = vmatpush1.bf16.msra.mxu0 0
        %638 = vmatprep.subr.bf16.mxu0 0
        %639 = vmatpush1.bf16.msra.mxu0 0
        %640 = vmatprep.subr.bf16.mxu0 0
        %641 = vmatpush1.bf16.msra.mxu0 0
        %642 = vmatprep.subr.bf16.mxu0 0
        %643 = vmatpush1.bf16.msra.mxu0 0
        %644 = vmatprep.subr.bf16.mxu0 0
        %645 = vmatpush1.bf16.msra.mxu0 0
        %646 = vmatprep.subr.bf16.mxu0 0
        %647 = vmatpush1.bf16.msra.mxu0 0
        %648 = vmatprep.subr.bf16.mxu0 0
        %649 = vmatpush1.bf16.msra.mxu0 0
        %650 = vmatprep.subr.bf16.mxu0 0
        %651 = vmatpush1.bf16.msra.mxu0 0
        %652 = vmatprep.mubr.bf16.mxu0 0
        %653 = vmatmul.mubr.bf16.gmra.mrb[0].mxu0 %v509
        %v654 = vpop.f32.mrb[0].mxu0
        %v655 = vadd.f32 0.0, %v654
        %v656 = vpop.f32.mrb[0].mxu0
        %v657 = vpop.f32.mrb[0].mxu0
        %v658 = vadd.f32 0.0, %v657
        %v659 = vpop.f32.mrb[0].mxu0
        %660 = vmatprep.mubr.bf16.mxu0 0
        %661 = vmatmul.mubr.bf16.gmra.mrb[0].mxu0 %v511
        %v662 = vpop.f32.mrb[0].mxu0
        %v663 = vadd.f32 0.0, %v662
        %v664 = vpop.f32.mrb[0].mxu0
        %v665 = vpop.f32.mrb[0].mxu0
        %v666 = vadd.f32 0.0, %v665
        %v667 = vpop.f32.mrb[0].mxu0
        %668 = vmatprep.mubr.bf16.mxu0 0
        %669 = vmatmul.mubr.bf16.gmra.mrb[0].mxu0 %v513
        %v670 = vpop.f32.mrb[0].mxu0
        %v671 = vadd.f32 0.0, %v670
        %v672 = vpop.f32.mrb[0].mxu0
        %v673 = vpop.f32.mrb[0].mxu0
        %v674 = vadd.f32 0.0, %v673
        %v675 = vpop.f32.mrb[0].mxu0
        %676 = vdwg.mxu0
        %v677 = vadd.f32 %v590, %v655
        %v678 = vadd.f32 %v591, %v658
        %v679 = vadd.f32 %v592, %v663
        %v680 = vadd.f32 %v593, %v666
        %v681 = vadd.f32 %v594, %v671
        %v682 = vadd.f32 %v595, %v674
        %683 = vst.msk [vmem:[#allocation2 + $0x10] sm:$0xff] %vm474, %v677
        %684 = vst.msk [vmem:[#allocation2 + $0x18] sm:$0xff] %vm474, %v678
        %685 = vst.msk [vmem:[#allocation2 + $0x20] sm:$0xff] %vm474, %v679
        %686 = vst.msk [vmem:[#allocation2 + $0x28] sm:$0xff] %vm474, %v680
        %687 = vst.msk [vmem:[#allocation2 + $0x30] sm:$0xff] %vm474, %v681
        %688 = vst.msk [vmem:[#allocation2 + $0x38] sm:$0xff] %vm474, %v682
        %v689 = vld [vmem:[#allocation2] sm:$0xff]
        %v690 = vld [vmem:[#allocation2 + $0x8] sm:$0xff]
        %v691 = vld [vmem:[#allocation2 + $0x10] sm:$0xff]
        %v692 = vld [vmem:[#allocation2 + $0x18] sm:$0xff]
        %v693 = vld [vmem:[#allocation2 + $0x20] sm:$0xff]
        %v694 = vld [vmem:[#allocation2 + $0x28] sm:$0xff]
        %s695 = scalar_lea.vmem %s3, 48
        %v696 = vld [vmem:[%s695] sm:$0xf]
        %v697 = vld [vmem:[%s695 + $0x4] sm:$0xf]
        %v698 = vld [vmem:[%s695 + $0x8] sm:$0xf]
        %v699 = vld [vmem:[%s695 + $0xc] sm:$0xf]
        %v700 = vld [vmem:[%s695 + $0x10] sm:$0xf]
        %v701 = vld [vmem:[%s695 + $0x14] sm:$0xf]
        %v708 = vunpack.c.l.b16 %v696
        %v709 = vunpack.c.l.b16 %v697
        %v710 = vunpack.c.l.b16 %v698
        %v711 = vunpack.c.l.b16 %v699
        %v712 = vunpack.c.l.b16 %v700
        %v713 = vunpack.c.l.b16 %v701
        %v714 = vpack.c.b16 %v709, %v708
        %v715 = vpack.c.b16 %v711, %v710
        %v716 = vpack.c.b16 %v713, %v712
        %720 = vmatprep.subr.bf16.mxu0 0
        %721 = vmatpush1.bf16.msra.mxu0 %v714
        %722 = vmatprep.subr.bf16.mxu0 0
        %723 = vmatpush1.bf16.msra.mxu0 %v715
        %724 = vmatprep.subr.bf16.mxu0 0
        %725 = vmatpush1.bf16.msra.mxu0 %v716
        %726 = vmatprep.subr.bf16.mxu0 0
        %727 = vmatpush1.bf16.msra.mxu0 0
        %728 = vmatprep.subr.bf16.mxu0 0
        %729 = vmatpush1.bf16.msra.mxu0 0
        %730 = vmatprep.subr.bf16.mxu0 0
        %731 = vmatpush1.bf16.msra.mxu0 0
        %732 = vmatprep.subr.bf16.mxu0 0
        %733 = vmatpush1.bf16.msra.mxu0 0
        %734 = vmatprep.subr.bf16.mxu0 0
        %735 = vmatpush1.bf16.msra.mxu0 0
        %736 = vmatprep.subr.bf16.mxu0 0
        %737 = vmatpush1.bf16.msra.mxu0 0
        %738 = vmatprep.subr.bf16.mxu0 0
        %739 = vmatpush1.bf16.msra.mxu0 0
        %740 = vmatprep.subr.bf16.mxu0 0
        %741 = vmatpush1.bf16.msra.mxu0 0
        %742 = vmatprep.subr.bf16.mxu0 0
        %743 = vmatpush1.bf16.msra.mxu0 0
        %744 = vmatprep.subr.bf16.mxu0 0
        %745 = vmatpush1.bf16.msra.mxu0 0
        %746 = vmatprep.subr.bf16.mxu0 0
        %747 = vmatpush1.bf16.msra.mxu0 0
        %748 = vmatprep.subr.bf16.mxu0 0
        %749 = vmatpush1.bf16.msra.mxu0 0
        %750 = vmatprep.subr.bf16.mxu0 0
        %751 = vmatpush1.bf16.msra.mxu0 0
        %752 = vmatprep.mubr.bf16.mxu0 0
        %753 = vmatmul.mubr.bf16.gmra.mrb[0].mxu0 %v511
        %v754 = vpop.f32.mrb[0].mxu0
        %v755 = vadd.f32 0.0, %v754
        %v756 = vpop.f32.mrb[0].mxu0
        %v757 = vpop.f32.mrb[0].mxu0
        %v758 = vadd.f32 0.0, %v757
        %v759 = vpop.f32.mrb[0].mxu0
        %760 = vmatprep.mubr.bf16.mxu0 0
        %761 = vmatmul.mubr.bf16.gmra.mrb[0].mxu0 %v513
        %v762 = vpop.f32.mrb[0].mxu0
        %v763 = vadd.f32 0.0, %v762
        %v764 = vpop.f32.mrb[0].mxu0
        %v765 = vpop.f32.mrb[0].mxu0
        %v766 = vadd.f32 0.0, %v765
        %v767 = vpop.f32.mrb[0].mxu0
        %768 = vmatprep.mubr.bf16.mxu0 0
        %769 = vmatmul.mubr.bf16.gmra.mrb[0].mxu0 %v515
        %v770 = vpop.f32.mrb[0].mxu0
        %v771 = vadd.f32 0.0, %v770
        %v772 = vpop.f32.mrb[0].mxu0
        %v773 = vpop.f32.mrb[0].mxu0
        %v774 = vadd.f32 0.0, %v773
        %v775 = vpop.f32.mrb[0].mxu0
        %776 = vdwg.mxu0
        %v777 = vadd.f32 %v689, %v755
        %v778 = vadd.f32 %v690, %v758
        %v779 = vadd.f32 %v691, %v763
        %v780 = vadd.f32 %v692, %v766
        %v781 = vadd.f32 %v693, %v771
        %v782 = vadd.f32 %v694, %v774
        %783 = vst.msk [vmem:[#allocation2] sm:$0xff] %vm474, %v777
        %784 = vst.msk [vmem:[#allocation2 + $0x8] sm:$0xff] %vm474, %v778
        %785 = vst.msk [vmem:[#allocation2 + $0x10] sm:$0xff] %vm474, %v779
        %786 = vst.msk [vmem:[#allocation2 + $0x18] sm:$0xff] %vm474, %v780
        %787 = vst.msk [vmem:[#allocation2 + $0x20] sm:$0xff] %vm474, %v781
        %788 = vst.msk [vmem:[#allocation2 + $0x28] sm:$0xff] %vm474, %v782
        %p789 = scmp.gt.s32.totalorder %s29, 0
        // Predicated region
        $region49: #{tpu_custom_call.1} parent=35 // pred_check
          %p790 = pneg %p789
        $region50: #{tpu_custom_call.1} parent=35 // pred_check_branch
          %792 = sbr.rel (%p790) target = $region52
        $region51: #{tpu_custom_call.1} parent=35 // pred_region
          %v793 = vld [vmem:[%s300] sm:$0xf]
          %v794 = vld [vmem:[%s300 + $0x4] sm:$0xf]
          %v797 = vunpack.c.l.b16 %v793
          %v798 = vunpack.c.l.b16 %v794
          %v799 = vpack.c.b16 %v798, %v797
          %v801 = vshrl.u32 %v799, 16
          %v803 = vrot.slane %v801, 7
          %v804 = vshll.u32 %v799, 16
          %v806 = vor.u32 %v803, %v804
          %v808 = vsel %vm417, 0, %v806
          %v809 = vrot.slane %v804, 1
          %v810 = vor.u32 %v801, %v809
          %v812 = vsel %vm436, %v810, 0
          %813 = vrot.lane.b32.xlu0 %v799, 16
          %v814 = vpop.permute.xlu0 %813
          %816 = vrot.lane.b32.xlu0 %v812, 32
          %v817 = vpop.permute.xlu0 %816
          %v820 = vsel %vm461, %v808, %v814
          %v822 = vsel %vm474, %v820, %v817
          %v823 = vld [vmem:[#allocation2] sm:$0xff]
          %v824 = vld [vmem:[#allocation2 + $0x8] sm:$0xff]
          %v825 = vld [vmem:[%s3] sm:$0xf]
          %v826 = vld [vmem:[%s3 + $0x4] sm:$0xf]
          %v827 = vld [vmem:[%s3 + $0x8] sm:$0xf]
          %v828 = vld [vmem:[%s3 + $0xc] sm:$0xf]
          %v829 = vld [vmem:[%s3 + $0x10] sm:$0xf]
          %v830 = vld [vmem:[%s3 + $0x14] sm:$0xf]
          %v837 = vunpack.c.l.b16 %v825
          %v838 = vunpack.c.l.b16 %v826
          %v839 = vunpack.c.l.b16 %v827
          %v840 = vunpack.c.l.b16 %v828
          %v841 = vunpack.c.l.b16 %v829
          %v842 = vunpack.c.l.b16 %v830
          %v843 = vpack.c.b16 %v838, %v837
          %v844 = vpack.c.b16 %v840, %v839
          %v845 = vpack.c.b16 %v842, %v841
          %v849 = vsel %vm508, %v822, 0
          %851 = vmatprep.subr.bf16.mxu0 0
          %852 = vmatpush1.bf16.msra.mxu0 %v843
          %853 = vmatprep.subr.bf16.mxu0 0
          %854 = vmatpush1.bf16.msra.mxu0 %v844
          %855 = vmatprep.subr.bf16.mxu0 0
          %856 = vmatpush1.bf16.msra.mxu0 %v845
          %857 = vmatprep.subr.bf16.mxu0 0
          %858 = vmatpush1.bf16.msra.mxu0 0
          %859 = vmatprep.subr.bf16.mxu0 0
          %860 = vmatpush1.bf16.msra.mxu0 0
          %861 = vmatprep.subr.bf16.mxu0 0
          %862 = vmatpush1.bf16.msra.mxu0 0
          %863 = vmatprep.subr.bf16.mxu0 0
          %864 = vmatpush1.bf16.msra.mxu0 0
          %865 = vmatprep.subr.bf16.mxu0 0
          %866 = vmatpush1.bf16.msra.mxu0 0
          %867 = vmatprep.subr.bf16.mxu0 0
          %868 = vmatpush1.bf16.msra.mxu0 0
          %869 = vmatprep.subr.bf16.mxu0 0
          %870 = vmatpush1.bf16.msra.mxu0 0
          %871 = vmatprep.subr.bf16.mxu0 0
          %872 = vmatpush1.bf16.msra.mxu0 0
          %873 = vmatprep.subr.bf16.mxu0 0
          %874 = vmatpush1.bf16.msra.mxu0 0
          %875 = vmatprep.subr.bf16.mxu0 0
          %876 = vmatpush1.bf16.msra.mxu0 0
          %877 = vmatprep.subr.bf16.mxu0 0
          %878 = vmatpush1.bf16.msra.mxu0 0
          %879 = vmatprep.subr.bf16.mxu0 0
          %880 = vmatpush1.bf16.msra.mxu0 0
          %881 = vmatprep.subr.bf16.mxu0 0
          %882 = vmatpush1.bf16.msra.mxu0 0
          %883 = vmatprep.mubr.bf16.mxu0 0
          %884 = vmatmul.mubr.bf16.gmra.mrb[0].mxu0 %v849
          %v885 = vpop.f32.mrb[0].mxu0
          %v886 = vadd.f32 0.0, %v885
          %v887 = vpop.f32.mrb[0].mxu0
          %v888 = vpop.f32.mrb[0].mxu0
          %v889 = vadd.f32 0.0, %v888
          %v890 = vpop.f32.mrb[0].mxu0
          %891 = vdwg.mxu0
          %v892 = vadd.f32 %v823, %v886
          %v893 = vadd.f32 %v824, %v889
          %894 = vst.msk [vmem:[#allocation2] sm:$0xff] %vm474, %v892
          %895 = vst.msk [vmem:[#allocation2 + $0x8] sm:$0xff] %vm474, %v893
        $region52: #{tpu_custom_call.1} parent=35 // pred_fallthru
          _
        %p896 = scmp.lt.s32.totalorder %s29, 3
        // Predicated region
        $region53: #{tpu_custom_call.1} parent=35 // pred_check
          %p897 = pneg %p896
        $region54: #{tpu_custom_call.1} parent=35 // pred_check_branch
          %899 = sbr.rel (%p897) target = $region56
        $region55: #{tpu_custom_call.1} parent=35 // pred_region
          %v900 = vld [vmem:[%s309] sm:$0xf]
          %v901 = vld [vmem:[%s309 + $0x4] sm:$0xf]
          %v904 = vunpack.c.l.b16 %v900
          %v905 = vunpack.c.l.b16 %v901
          %v906 = vpack.c.b16 %v905, %v904
          %v908 = vshrl.u32 %v906, 16
          %v910 = vrot.slane %v908, 7
          %v911 = vshll.u32 %v906, 16
          %v913 = vor.u32 %v910, %v911
          %v915 = vsel %vm417, 0, %v913
          %v916 = vrot.slane %v911, 1
          %v917 = vor.u32 %v908, %v916
          %v919 = vsel %vm436, %v917, 0
          %920 = vrot.lane.b32.xlu0 %v906, 16
          %v921 = vpop.permute.xlu0 %920
          %923 = vrot.lane.b32.xlu0 %v919, 32
          %v924 = vpop.permute.xlu0 %923
          %v927 = vsel %vm461, %v915, %v921
          %v929 = vsel %vm474, %v927, %v924
          %v930 = vld [vmem:[#allocation2 + $0x30] sm:$0xff]
          %v931 = vld [vmem:[#allocation2 + $0x38] sm:$0xff]
          %v932 = vld [vmem:[%s695] sm:$0xf]
          %v933 = vld [vmem:[%s695 + $0x4] sm:$0xf]
          %v934 = vld [vmem:[%s695 + $0x8] sm:$0xf]
          %v935 = vld [vmem:[%s695 + $0xc] sm:$0xf]
          %v936 = vld [vmem:[%s695 + $0x10] sm:$0xf]
          %v937 = vld [vmem:[%s695 + $0x14] sm:$0xf]
          %v944 = vunpack.c.l.b16 %v932
          %v945 = vunpack.c.l.b16 %v933
          %v946 = vunpack.c.l.b16 %v934
          %v947 = vunpack.c.l.b16 %v935
          %v948 = vunpack.c.l.b16 %v936
          %v949 = vunpack.c.l.b16 %v937
          %v950 = vpack.c.b16 %v945, %v944
          %v951 = vpack.c.b16 %v947, %v946
          %v952 = vpack.c.b16 %v949, %v948
          %v956 = vsel %vm508, %v929, 0
          %958 = vmatprep.subr.bf16.mxu0 0
          %959 = vmatpush1.bf16.msra.mxu0 %v950
          %960 = vmatprep.subr.bf16.mxu0 0
          %961 = vmatpush1.bf16.msra.mxu0 %v951
          %962 = vmatprep.subr.bf16.mxu0 0
          %963 = vmatpush1.bf16.msra.mxu0 %v952
          %964 = vmatprep.subr.bf16.mxu0 0
          %965 = vmatpush1.bf16.msra.mxu0 0
          %966 = vmatprep.subr.bf16.mxu0 0
          %967 = vmatpush1.bf16.msra.mxu0 0
          %968 = vmatprep.subr.bf16.mxu0 0
          %969 = vmatpush1.bf16.msra.mxu0 0
          %970 = vmatprep.subr.bf16.mxu0 0
          %971 = vmatpush1.bf16.msra.mxu0 0
          %972 = vmatprep.subr.bf16.mxu0 0
          %973 = vmatpush1.bf16.msra.mxu0 0
          %974 = vmatprep.subr.bf16.mxu0 0
          %975 = vmatpush1.bf16.msra.mxu0 0
          %976 = vmatprep.subr.bf16.mxu0 0
          %977 = vmatpush1.bf16.msra.mxu0 0
          %978 = vmatprep.subr.bf16.mxu0 0
          %979 = vmatpush1.bf16.msra.mxu0 0
          %980 = vmatprep.subr.bf16.mxu0 0
          %981 = vmatpush1.bf16.msra.mxu0 0
          %982 = vmatprep.subr.bf16.mxu0 0
          %983 = vmatpush1.bf16.msra.mxu0 0
          %984 = vmatprep.subr.bf16.mxu0 0
          %985 = vmatpush1.bf16.msra.mxu0 0
          %986 = vmatprep.subr.bf16.mxu0 0
          %987 = vmatpush1.bf16.msra.mxu0 0
          %988 = vmatprep.subr.bf16.mxu0 0
          %989 = vmatpush1.bf16.msra.mxu0 0
          %990 = vmatprep.mubr.bf16.mxu0 0
          %991 = vmatmul.mubr.bf16.gmra.mrb[0].mxu0 %v956
          %v992 = vpop.f32.mrb[0].mxu0
          %v993 = vadd.f32 0.0, %v992
          %v994 = vpop.f32.mrb[0].mxu0
          %v995 = vpop.f32.mrb[0].mxu0
          %v996 = vadd.f32 0.0, %v995
          %v997 = vpop.f32.mrb[0].mxu0
          %998 = vdwg.mxu0
          %v999 = vadd.f32 %v930, %v993
          %v1000 = vadd.f32 %v931, %v996
          %1001 = vst.msk [vmem:[#allocation2 + $0x30] sm:$0xff] %vm474, %v999
          %1002 = vst.msk [vmem:[#allocation2 + $0x38] sm:$0xff] %vm474, %v1000
        $region56: #{tpu_custom_call.1} parent=35 // pred_fallthru
          _
        %v1003 = vld [vmem:[#allocation2] sm:$0xff]
        %v1004 = vld [vmem:[#allocation2 + $0x8] sm:$0xff]
        %v1005 = vld [vmem:[#allocation2 + $0x10] sm:$0xff]
        %v1006 = vld [vmem:[#allocation2 + $0x18] sm:$0xff]
        %v1007 = vld [vmem:[#allocation2 + $0x20] sm:$0xff]
        %v1008 = vld [vmem:[#allocation2 + $0x28] sm:$0xff]
        %v1009 = vld [vmem:[#allocation2 + $0x30] sm:$0xff]
        %v1010 = vld [vmem:[#allocation2 + $0x38] sm:$0xff]
        %v1011 = vmax.f32 %v1003, 0.0
        %v1012 = vmax.f32 %v1004, 0.0
        %v1013 = vmax.f32 %v1005, 0.0
        %v1014 = vmax.f32 %v1006, 0.0
        %v1015 = vmax.f32 %v1007, 0.0
        %v1016 = vmax.f32 %v1008, 0.0
        %v1017 = vmax.f32 %v1009, 0.0
        %v1018 = vmax.f32 %v1010, 0.0
        %v1019 = vpack.c.bf16 %v1012, %v1011
        %v1020 = vpack.c.bf16 %v1014, %v1013
        %v1021 = vpack.c.bf16 %v1016, %v1015
        %v1022 = vpack.c.bf16 %v1018, %v1017
        %v1027 = vunpack.c.l.b16 %v1019
        %v1028 = vunpack.c.h.b16 %v1019
        %v1029 = vunpack.c.l.b16 %v1020
        %v1030 = vunpack.c.h.b16 %v1020
        %v1031 = vunpack.c.l.b16 %v1021
        %v1032 = vunpack.c.h.b16 %v1021
        %v1033 = vunpack.c.l.b16 %v1022
        %v1034 = vunpack.c.h.b16 %v1022
        %v1035 = vpack.c.b16 %v1027, %v1027
        %v1036 = vpack.c.b16 %v1028, %v1028
        %v1037 = vpack.c.b16 %v1029, %v1029
        %v1038 = vpack.c.b16 %v1030, %v1030
        %v1039 = vpack.c.b16 %v1031, %v1031
        %v1040 = vpack.c.b16 %v1032, %v1032
        %v1041 = vpack.c.b16 %v1033, %v1033
        %v1042 = vpack.c.b16 %v1034, %v1034
        %vm1051 = vcmask 257024
        %1052 = vst.msk [vmem:[%s343] sm:$0xf] %vm1051, %v1035
        %1053 = vst.msk [vmem:[%s343 + $0x4] sm:$0xf] %vm1051, %v1036
        %1054 = vst.msk [vmem:[%s343 + $0x8] sm:$0xf] %vm1051, %v1037
        %1055 = vst.msk [vmem:[%s343 + $0xc] sm:$0xf] %vm1051, %v1038
        %1056 = vst.msk [vmem:[%s343 + $0x10] sm:$0xf] %vm1051, %v1039
        %1057 = vst.msk [vmem:[%s343 + $0x14] sm:$0xf] %vm1051, %v1040
        %1058 = vst.msk [vmem:[%s343 + $0x18] sm:$0xf] %vm1051, %v1041
        %1059 = vst.msk [vmem:[%s343 + $0x1c] sm:$0xf] %vm1051, %v1042
        %s1060 = sand.u32 %s167, 1
        %s1061 = scalar_lea.sflag [#allocation5], %s1060
        %s1062 = sand.u32 %s167, 1
        %s1063 = smul.addr %s1062, 32
        %s1064 = scalar_lea.vmem [#allocation9], %s1063
        // Predicated region
        $region57: #{tpu_custom_call.1} parent=35 // pred_check
          %p1065 = pneg %p177
        $region58: #{tpu_custom_call.1} parent=35 // pred_check_branch
          %1067 = sbr.rel (%p1065) target = $region60
        $region59: #{tpu_custom_call.1} parent=35 // pred_region
          %s1068 = smul.u32 4, %s29
          %s1070 = ssub.s32 512, 512
          %1071 = vsyncadd %s1061, %s1070
          %s1072 = smul.addr %s1068, 2
          %s1073 = smul.addr %s28, 32
          %s1074 = sadd.s32 %s1072, %s1073
          %s1075 = smul.addr %s1074, 64
          %s1076 = scalar_lea.hbm %s4, %s1075
          %s1077 = sshll.u32 %s1064, 4
          %s1078 = int_to_ptr.vmem [resolvable:$true] %s1077
          %1083 = dma.vmem_to_hbm [thread:$0]  %s1078, 512, %s1076, %s1061, 64, 64, 4
        $region60: #{tpu_custom_call.1} parent=35 // pred_fallthru
          _
      $region36: #{tpu_custom_call.1} parent=5 // pred_fallthru
        _
      %p1084 = scmp.le.s32.totalorder 2, %s19
      // Predicated region
      $region61: #{tpu_custom_call.1} parent=5 // pred_check
        %p1085 = pneg %p1084
      $region62: #{tpu_custom_call.1} parent=5 // pred_check_branch
        %1087 = sbr.rel (%p1085) target = $region64
      $region63: #{tpu_custom_call.1} parent=5 // pred_region
        %s1088 = ssub.s32 %s19, 2
        // Predicated region
        $region65: #{tpu_custom_call.1} parent=63 // pred_check
          %p1089 = pneg %p183
        $region66: #{tpu_custom_call.1} parent=63 // pred_check_branch
          %1091 = sbr.rel (%p1089) target = $region68
        $region67: #{tpu_custom_call.1} parent=63 // pred_region
          %s1092 = sand.u32 %s168, 1
          %s1093 = scalar_lea.sflag [#allocation5], %s1092
          %s1094 = sand.u32 %s168, 1
          %s1095 = smul.addr %s1094, 32
          %s1096 = scalar_lea.vmem [#allocation9], %s1095
          %1097 = dma.done %s1093, 512
        $region68: #{tpu_custom_call.1} parent=63 // pred_fallthru
          _
      $region64: #{tpu_custom_call.1} parent=5 // pred_fallthru
        _
    $region6: #{tpu_custom_call.1} parent=1 // loop_footer
      %s23 = sadd.s32 1, %s19
    $region7: #{tpu_custom_call.1} parent=1 // loop_footer_branch
      %18 = sbr.rel target = $region3
    $region8: #{tpu_custom_call.1} parent=1 // loop_exit
      _
    %1098 = vsyncpa [#allocation4], 1
    %s1099 = scalar_lea.sflag [#allocation4], 1
    %1100 = vsyncpa %s1099, 1
    %1101 = vsyncpa [#allocation7], 1
    %s1102 = scalar_lea.sflag [#allocation7], 1
    %1103 = vsyncpa %s1102, 1
    %1104 = vsyncpa [#allocation5], 1
    %s1105 = scalar_lea.sflag [#allocation5], 1
    %1106 = vsyncpa %s1105, 1

</llo_original>
